<compile_context>
chip_gen: v6e
topology: v6e:2x2x1
jax: 0.10.0
libtpu: 0.0.40
codegen_flags: <defaults>
</compile_context>

<pallas_src>
import numpy as np
import jax
import jax.numpy as jnp
from jax.experimental import pallas as pl
from jax.experimental.pallas import tpu as pltpu


def _round_up(x, m):
    return ((x + m - 1) // m) * m


def _sublane_multiple(dtype):
    itemsize = jnp.dtype(dtype).itemsize
    return {4: 8, 2: 16, 1: 32}.get(itemsize, 8)


def _padded_tile_bytes(block_shape, dtype):
    """VMEM bytes of one buffered tile, incl. (sublane, lane) padding."""
    itemsize = jnp.dtype(dtype).itemsize
    sub = _sublane_multiple(dtype)
    if len(block_shape) < 2:
        return _round_up(int(np.prod(block_shape)) if block_shape else 1, 128) * itemsize
    lead = 1
    for d in block_shape[:-2]:
        lead *= d
    return (lead * _round_up(block_shape[-2], sub)
            * _round_up(block_shape[-1], 128) * itemsize)


def _make_flatten_kernel(mid_shape, w):
    """Kernel: x_ref (bb, *mid_shape, w)  ->  o_ref (bb, prod(mid_shape)*w)."""
    rows = 1
    for d in mid_shape:
        rows *= d

    def kernel(x_ref, o_ref):
        # Statically-unrolled repack: copy each trailing-w row of the N-D tile
        # to its row-major position in the lane-dense flattened output tile.
        for r in range(rows):
            mid_idx = np.unravel_index(r, mid_shape)
            src = x_ref[(slice(None),) + tuple(int(i) for i in mid_idx)
                        + (slice(None),)]
            o_ref[:, r * w:(r + 1) * w] = src

    return kernel


def linear_view(x, *, tile_byte_budget=2 * 1024 * 1024):
    """Flatten all dims after the first: (B, d1, d2, ...) -> (B, d1*d2*...)."""
    B = x.shape[0]
    trailing = x.shape[1:]
    N = 1
    for d in trailing:
        N *= d

    if x.ndim <= 2 or B == 0 or N == 0:
        # Already flat (or degenerate): .view(B, -1) is a pure metadata op —
        # a Pallas pass here would only add an HBM read+write for nothing.
        return jnp.reshape(x, (B, N))

    k = len(trailing)                 # number of trailing dims (>= 2 here)
    d1, w = trailing[0], trailing[-1]
    rest = N // d1                    # flattened width of one d1 slice
    dtype = x.dtype
    itemsize = jnp.dtype(dtype).itemsize
    sub = _sublane_multiple(dtype)

    # ---- batch blocking ----------------------------------------------------
    bb = B if B <= 64 else 64         # multiple of 8 when blocked

    # ---- chunk the first trailing dim (d1) ----------------------------------
    # Output tile width is c1*rest; it must be a multiple of 128 lanes (or the
    # full N).  For 3-D inputs c1 is also the sublane dim of the input tile.
    def _ok(c):
        if d1 % c != 0 or (c * rest) % 128 != 0:
            return False
        if k == 2 and not (c == d1 or c % sub == 0):
            return False
        in_blk = (bb, c) + trailing[1:]
        out_blk = (bb, c * rest)
        return (_padded_tile_bytes(in_blk, dtype)
                + _padded_tile_bytes(out_blk, dtype)) <= tile_byte_budget

    cands = [c for c in range(1, d1 + 1) if _ok(c)]
    if cands:
        c1 = max(cands)
        # v7x megacore: prefer >= 2 grid steps along the flattened axis so both
        # TensorCores (and their DMA streams) get work, while keeping tiles
        # lane-dense (>= 512 lanes, multiple of 128).
        if d1 // c1 < 2:
            split = [c for c in cands if d1 // c >= 2 and c * rest >= 512]
            if split:
                c1 = max(split)
        chunk_w = c1 * rest
    else:
        c1 = d1
        chunk_w = N                   # full-width block (exempt from 128 rule)

    # TODO(synk): for very large prod(trailing[:-1]) the static unroll bloats;
    # switch to a single in-kernel reshape once Mosaic supports the general
    # (sublane+lane)-collapsing shape cast.

    in_block = (bb, c1) + trailing[1:]
    out_block = (bb, chunk_w)
    grid = (pl.cdiv(B, bb), d1 // c1)

    # VMEM: double-buffered padded in+out tiles, +25% headroom, floor for
    # Mosaic internal scratch, capped well under v7x's 64 MiB physical VMEM.
    tiles = (_padded_tile_bytes(in_block, dtype)
             + _padded_tile_bytes(out_block, dtype))
    vmem_limit = int(min(max(4 * 1024 * 1024, 2.5 * tiles + (1 << 20)),
                         48 * 1024 * 1024))

    kernel = _make_flatten_kernel((c1,) + trailing[1:-1], w)

    def in_map(i, j):
        return (i, j) + (0,) * (k - 1)

    def out_map(i, j):
        return (i, j)

    return pl.pallas_call(
        kernel,
        out_shape=jax.ShapeDtypeStruct((B, N), dtype),
        grid=grid,
        in_specs=[pl.BlockSpec(in_block, in_map)],
        out_specs=pl.BlockSpec(out_block, out_map),
        # Zero-FLOP, pure HBM-bandwidth op: exactly one read + one write.
        cost_estimate=pl.CostEstimate(
            flops=0, transcendentals=0, bytes_accessed=2 * B * N * itemsize
        ),
        compiler_params=pltpu.CompilerParams(
            dimension_semantics=("parallel", "parallel"),
            vmem_limit_bytes=vmem_limit,
        ),
    )(x)


if __name__ == "__main__":
    key = jax.random.PRNGKey(0)
    # Small NCHW input consistent with the module's usage.
    x = jax.random.normal(key, (2, 4, 16, 16), dtype=jnp.float32)

    y = jax.jit(linear_view)(x)
    y = jax.block_until_ready(y)

    # Reference semantics: torch .view(B, -1) == row-major reshape.
    y_ref = jnp.reshape(x, (x.shape[0], -1))
    assert y.shape == (2, 4 * 16 * 16), y.shape
    assert y.dtype == x.dtype
    assert bool(jnp.array_equal(y, y_ref))

    print("KERNEL_OK")
</pallas_src>

<mosaic_0001>
module attributes {stable_mosaic.version = 11 : i64} {
  func.func @kernel(%arg0: i32, %arg1: i32, %arg2: memref<2x2x16x16xf32, #tpu.memory_space<vmem>>, %arg3: memref<2x512xf32, #tpu.memory_space<vmem>>) attributes {dimension_semantics = [#tpu.dimension_semantics<parallel>, #tpu.dimension_semantics<parallel>], iteration_bounds = array<i64: 1, 2>, scalar_prefetch = 0 : i64, scratch_operands = 0 : i64, tpu.core_type = #tpu.core_type<tc>, window_params = [{transform_indices = @transform_0, window_bounds = array<i64: 2, 2, 16, 16>}, {transform_indices = @transform_1, window_bounds = array<i64: 2, 512>}]} {
    %c0 = arith.constant 0 : index
    %c0_0 = arith.constant 0 : index
    %c0_1 = arith.constant 0 : index
    %c0_2 = arith.constant 0 : index
    %0 = vector.load %arg2[%c0, %c0_0, %c0_1, %c0_2] : memref<2x2x16x16xf32, #tpu.memory_space<vmem>>, vector<2x1x1x16xf32>
    %1 = vector.shape_cast %0 : vector<2x1x1x16xf32> to vector<2x16xf32>
    %c0_3 = arith.constant 0 : index
    %c0_4 = arith.constant 0 : index
    %2 = vector.load %arg3[%c0_3, %c0_4] : memref<2x512xf32, #tpu.memory_space<vmem>>, vector<2x16xf32>
    tpu.vector_store %arg3[%c0_3, %c0_4], %1 {strides = array<i32>} : memref<2x512xf32, #tpu.memory_space<vmem>>, vector<2x16xf32>,
    %c0_5 = arith.constant 0 : index
    %c0_6 = arith.constant 0 : index
    %c1 = arith.constant 1 : index
    %c0_7 = arith.constant 0 : index
    %3 = vector.load %arg2[%c0_5, %c0_6, %c1, %c0_7] : memref<2x2x16x16xf32, #tpu.memory_space<vmem>>, vector<2x1x1x16xf32>
    %4 = vector.shape_cast %3 : vector<2x1x1x16xf32> to vector<2x16xf32>
    %c0_8 = arith.constant 0 : index
    %c16 = arith.constant 16 : index
    %5 = vector.load %arg3[%c0_8, %c16] : memref<2x512xf32, #tpu.memory_space<vmem>>, vector<2x16xf32>
    tpu.vector_store %arg3[%c0_8, %c16], %4 {strides = array<i32>} : memref<2x512xf32, #tpu.memory_space<vmem>>, vector<2x16xf32>,
    %c0_9 = arith.constant 0 : index
    %c0_10 = arith.constant 0 : index
    %c2 = arith.constant 2 : index
    %c0_11 = arith.constant 0 : index
    %6 = vector.load %arg2[%c0_9, %c0_10, %c2, %c0_11] : memref<2x2x16x16xf32, #tpu.memory_space<vmem>>, vector<2x1x1x16xf32>
    %7 = vector.shape_cast %6 : vector<2x1x1x16xf32> to vector<2x16xf32>
    %c0_12 = arith.constant 0 : index
    %c32 = arith.constant 32 : index
    %8 = vector.load %arg3[%c0_12, %c32] : memref<2x512xf32, #tpu.memory_space<vmem>>, vector<2x16xf32>
    tpu.vector_store %arg3[%c0_12, %c32], %7 {strides = array<i32>} : memref<2x512xf32, #tpu.memory_space<vmem>>, vector<2x16xf32>,
    %c0_13 = arith.constant 0 : index
    %c0_14 = arith.constant 0 : index
    %c3 = arith.constant 3 : index
    %c0_15 = arith.constant 0 : index
    %9 = vector.load %arg2[%c0_13, %c0_14, %c3, %c0_15] : memref<2x2x16x16xf32, #tpu.memory_space<vmem>>, vector<2x1x1x16xf32>
    %10 = vector.shape_cast %9 : vector<2x1x1x16xf32> to vector<2x16xf32>
    %c0_16 = arith.constant 0 : index
    %c48 = arith.constant 48 : index
    %11 = vector.load %arg3[%c0_16, %c48] : memref<2x512xf32, #tpu.memory_space<vmem>>, vector<2x16xf32>
    tpu.vector_store %arg3[%c0_16, %c48], %10 {strides = array<i32>} : memref<2x512xf32, #tpu.memory_space<vmem>>, vector<2x16xf32>,
    %c0_17 = arith.constant 0 : index
    %c0_18 = arith.constant 0 : index
    %c4 = arith.constant 4 : index
    %c0_19 = arith.constant 0 : index
    %12 = vector.load %arg2[%c0_17, %c0_18, %c4, %c0_19] : memref<2x2x16x16xf32, #tpu.memory_space<vmem>>, vector<2x1x1x16xf32>
    %13 = vector.shape_cast %12 : vector<2x1x1x16xf32> to vector<2x16xf32>
    %c0_20 = arith.constant 0 : index
    %c64 = arith.constant 64 : index
    %14 = vector.load %arg3[%c0_20, %c64] : memref<2x512xf32, #tpu.memory_space<vmem>>, vector<2x16xf32>
    tpu.vector_store %arg3[%c0_20, %c64], %13 {strides = array<i32>} : memref<2x512xf32, #tpu.memory_space<vmem>>, vector<2x16xf32>,
    %c0_21 = arith.constant 0 : index
    %c0_22 = arith.constant 0 : index
    %c5 = arith.constant 5 : index
    %c0_23 = arith.constant 0 : index
    %15 = vector.load %arg2[%c0_21, %c0_22, %c5, %c0_23] : memref<2x2x16x16xf32, #tpu.memory_space<vmem>>, vector<2x1x1x16xf32>
    %16 = vector.shape_cast %15 : vector<2x1x1x16xf32> to vector<2x16xf32>
    %c0_24 = arith.constant 0 : index
    %c80 = arith.constant 80 : index
    %17 = vector.load %arg3[%c0_24, %c80] : memref<2x512xf32, #tpu.memory_space<vmem>>, vector<2x16xf32>
    tpu.vector_store %arg3[%c0_24, %c80], %16 {strides = array<i32>} : memref<2x512xf32, #tpu.memory_space<vmem>>, vector<2x16xf32>,
    %c0_25 = arith.constant 0 : index
    %c0_26 = arith.constant 0 : index
    %c6 = arith.constant 6 : index
    %c0_27 = arith.constant 0 : index
    %18 = vector.load %arg2[%c0_25, %c0_26, %c6, %c0_27] : memref<2x2x16x16xf32, #tpu.memory_space<vmem>>, vector<2x1x1x16xf32>
    %19 = vector.shape_cast %18 : vector<2x1x1x16xf32> to vector<2x16xf32>
    %c0_28 = arith.constant 0 : index
    %c96 = arith.constant 96 : index
    %20 = vector.load %arg3[%c0_28, %c96] : memref<2x512xf32, #tpu.memory_space<vmem>>, vector<2x16xf32>
    tpu.vector_store %arg3[%c0_28, %c96], %19 {strides = array<i32>} : memref<2x512xf32, #tpu.memory_space<vmem>>, vector<2x16xf32>,
    %c0_29 = arith.constant 0 : index
    %c0_30 = arith.constant 0 : index
    %c7 = arith.constant 7 : index
    %c0_31 = arith.constant 0 : index
    %21 = vector.load %arg2[%c0_29, %c0_30, %c7, %c0_31] : memref<2x2x16x16xf32, #tpu.memory_space<vmem>>, vector<2x1x1x16xf32>
    %22 = vector.shape_cast %21 : vector<2x1x1x16xf32> to vector<2x16xf32>
    %c0_32 = arith.constant 0 : index
    %c112 = arith.constant 112 : index
    %23 = vector.load %arg3[%c0_32, %c112] : memref<2x512xf32, #tpu.memory_space<vmem>>, vector<2x16xf32>
    tpu.vector_store %arg3[%c0_32, %c112], %22 {strides = array<i32>} : memref<2x512xf32, #tpu.memory_space<vmem>>, vector<2x16xf32>,
    %c0_33 = arith.constant 0 : index
    %c0_34 = arith.constant 0 : index
    %c8 = arith.constant 8 : index
    %c0_35 = arith.constant 0 : index
    %24 = vector.load %arg2[%c0_33, %c0_34, %c8, %c0_35] : memref<2x2x16x16xf32, #tpu.memory_space<vmem>>, vector<2x1x1x16xf32>
    %25 = vector.shape_cast %24 : vector<2x1x1x16xf32> to vector<2x16xf32>
    %c0_36 = arith.constant 0 : index
    %c128 = arith.constant 128 : index
    %26 = vector.load %arg3[%c0_36, %c128] : memref<2x512xf32, #tpu.memory_space<vmem>>, vector<2x16xf32>
    tpu.vector_store %arg3[%c0_36, %c128], %25 {strides = array<i32>} : memref<2x512xf32, #tpu.memory_space<vmem>>, vector<2x16xf32>,
    %c0_37 = arith.constant 0 : index
    %c0_38 = arith.constant 0 : index
    %c9 = arith.constant 9 : index
    %c0_39 = arith.constant 0 : index
    %27 = vector.load %arg2[%c0_37, %c0_38, %c9, %c0_39] : memref<2x2x16x16xf32, #tpu.memory_space<vmem>>, vector<2x1x1x16xf32>
    %28 = vector.shape_cast %27 : vector<2x1x1x16xf32> to vector<2x16xf32>
    %c0_40 = arith.constant 0 : index
    %c144 = arith.constant 144 : index
    %29 = vector.load %arg3[%c0_40, %c144] : memref<2x512xf32, #tpu.memory_space<vmem>>, vector<2x16xf32>
    tpu.vector_store %arg3[%c0_40, %c144], %28 {strides = array<i32>} : memref<2x512xf32, #tpu.memory_space<vmem>>, vector<2x16xf32>,
    %c0_41 = arith.constant 0 : index
    %c0_42 = arith.constant 0 : index
    %c10 = arith.constant 10 : index
    %c0_43 = arith.constant 0 : index
    %30 = vector.load %arg2[%c0_41, %c0_42, %c10, %c0_43] : memref<2x2x16x16xf32, #tpu.memory_space<vmem>>, vector<2x1x1x16xf32>
    %31 = vector.shape_cast %30 : vector<2x1x1x16xf32> to vector<2x16xf32>
    %c0_44 = arith.constant 0 : index
    %c160 = arith.constant 160 : index
    %32 = vector.load %arg3[%c0_44, %c160] : memref<2x512xf32, #tpu.memory_space<vmem>>, vector<2x16xf32>
    tpu.vector_store %arg3[%c0_44, %c160], %31 {strides = array<i32>} : memref<2x512xf32, #tpu.memory_space<vmem>>, vector<2x16xf32>,
    %c0_45 = arith.constant 0 : index
    %c0_46 = arith.constant 0 : index
    %c11 = arith.constant 11 : index
    %c0_47 = arith.constant 0 : index
    %33 = vector.load %arg2[%c0_45, %c0_46, %c11, %c0_47] : memref<2x2x16x16xf32, #tpu.memory_space<vmem>>, vector<2x1x1x16xf32>
    %34 = vector.shape_cast %33 : vector<2x1x1x16xf32> to vector<2x16xf32>
    %c0_48 = arith.constant 0 : index
    %c176 = arith.constant 176 : index
    %35 = vector.load %arg3[%c0_48, %c176] : memref<2x512xf32, #tpu.memory_space<vmem>>, vector<2x16xf32>
    tpu.vector_store %arg3[%c0_48, %c176], %34 {strides = array<i32>} : memref<2x512xf32, #tpu.memory_space<vmem>>, vector<2x16xf32>,
    %c0_49 = arith.constant 0 : index
    %c0_50 = arith.constant 0 : index
    %c12 = arith.constant 12 : index
    %c0_51 = arith.constant 0 : index
    %36 = vector.load %arg2[%c0_49, %c0_50, %c12, %c0_51] : memref<2x2x16x16xf32, #tpu.memory_space<vmem>>, vector<2x1x1x16xf32>
    %37 = vector.shape_cast %36 : vector<2x1x1x16xf32> to vector<2x16xf32>
    %c0_52 = arith.constant 0 : index
    %c192 = arith.constant 192 : index
    %38 = vector.load %arg3[%c0_52, %c192] : memref<2x512xf32, #tpu.memory_space<vmem>>, vector<2x16xf32>
    tpu.vector_store %arg3[%c0_52, %c192], %37 {strides = array<i32>} : memref<2x512xf32, #tpu.memory_space<vmem>>, vector<2x16xf32>,
    %c0_53 = arith.constant 0 : index
    %c0_54 = arith.constant 0 : index
    %c13 = arith.constant 13 : index
    %c0_55 = arith.constant 0 : index
    %39 = vector.load %arg2[%c0_53, %c0_54, %c13, %c0_55] : memref<2x2x16x16xf32, #tpu.memory_space<vmem>>, vector<2x1x1x16xf32>
    %40 = vector.shape_cast %39 : vector<2x1x1x16xf32> to vector<2x16xf32>
    %c0_56 = arith.constant 0 : index
    %c208 = arith.constant 208 : index
    %41 = vector.load %arg3[%c0_56, %c208] : memref<2x512xf32, #tpu.memory_space<vmem>>, vector<2x16xf32>
    tpu.vector_store %arg3[%c0_56, %c208], %40 {strides = array<i32>} : memref<2x512xf32, #tpu.memory_space<vmem>>, vector<2x16xf32>,
    %c0_57 = arith.constant 0 : index
    %c0_58 = arith.constant 0 : index
    %c14 = arith.constant 14 : index
    %c0_59 = arith.constant 0 : index
    %42 = vector.load %arg2[%c0_57, %c0_58, %c14, %c0_59] : memref<2x2x16x16xf32, #tpu.memory_space<vmem>>, vector<2x1x1x16xf32>
    %43 = vector.shape_cast %42 : vector<2x1x1x16xf32> to vector<2x16xf32>
    %c0_60 = arith.constant 0 : index
    %c224 = arith.constant 224 : index
    %44 = vector.load %arg3[%c0_60, %c224] : memref<2x512xf32, #tpu.memory_space<vmem>>, vector<2x16xf32>
    tpu.vector_store %arg3[%c0_60, %c224], %43 {strides = array<i32>} : memref<2x512xf32, #tpu.memory_space<vmem>>, vector<2x16xf32>,
    %c0_61 = arith.constant 0 : index
    %c0_62 = arith.constant 0 : index
    %c15 = arith.constant 15 : index
    %c0_63 = arith.constant 0 : index
    %45 = vector.load %arg2[%c0_61, %c0_62, %c15, %c0_63] : memref<2x2x16x16xf32, #tpu.memory_space<vmem>>, vector<2x1x1x16xf32>
    %46 = vector.shape_cast %45 : vector<2x1x1x16xf32> to vector<2x16xf32>
    %c0_64 = arith.constant 0 : index
    %c240 = arith.constant 240 : index
    %47 = vector.load %arg3[%c0_64, %c240] : memref<2x512xf32, #tpu.memory_space<vmem>>, vector<2x16xf32>
    tpu.vector_store %arg3[%c0_64, %c240], %46 {strides = array<i32>} : memref<2x512xf32, #tpu.memory_space<vmem>>, vector<2x16xf32>,
    %c0_65 = arith.constant 0 : index
    %c1_66 = arith.constant 1 : index
    %c0_67 = arith.constant 0 : index
    %c0_68 = arith.constant 0 : index
    %48 = vector.load %arg2[%c0_65, %c1_66, %c0_67, %c0_68] : memref<2x2x16x16xf32, #tpu.memory_space<vmem>>, vector<2x1x1x16xf32>
    %49 = vector.shape_cast %48 : vector<2x1x1x16xf32> to vector<2x16xf32>
    %c0_69 = arith.constant 0 : index
    %c256 = arith.constant 256 : index
    %50 = vector.load %arg3[%c0_69, %c256] : memref<2x512xf32, #tpu.memory_space<vmem>>, vector<2x16xf32>
    tpu.vector_store %arg3[%c0_69, %c256], %49 {strides = array<i32>} : memref<2x512xf32, #tpu.memory_space<vmem>>, vector<2x16xf32>,
    %c0_70 = arith.constant 0 : index
    %c1_71 = arith.constant 1 : index
    %c1_72 = arith.constant 1 : index
    %c0_73 = arith.constant 0 : index
    %51 = vector.load %arg2[%c0_70, %c1_71, %c1_72, %c0_73] : memref<2x2x16x16xf32, #tpu.memory_space<vmem>>, vector<2x1x1x16xf32>
    %52 = vector.shape_cast %51 : vector<2x1x1x16xf32> to vector<2x16xf32>
    %c0_74 = arith.constant 0 : index
    %c272 = arith.constant 272 : index
    %53 = vector.load %arg3[%c0_74, %c272] : memref<2x512xf32, #tpu.memory_space<vmem>>, vector<2x16xf32>
    tpu.vector_store %arg3[%c0_74, %c272], %52 {strides = array<i32>} : memref<2x512xf32, #tpu.memory_space<vmem>>, vector<2x16xf32>,
    %c0_75 = arith.constant 0 : index
    %c1_76 = arith.constant 1 : index
    %c2_77 = arith.constant 2 : index
    %c0_78 = arith.constant 0 : index
    %54 = vector.load %arg2[%c0_75, %c1_76, %c2_77, %c0_78] : memref<2x2x16x16xf32, #tpu.memory_space<vmem>>, vector<2x1x1x16xf32>
    %55 = vector.shape_cast %54 : vector<2x1x1x16xf32> to vector<2x16xf32>
    %c0_79 = arith.constant 0 : index
    %c288 = arith.constant 288 : index
    %56 = vector.load %arg3[%c0_79, %c288] : memref<2x512xf32, #tpu.memory_space<vmem>>, vector<2x16xf32>
    tpu.vector_store %arg3[%c0_79, %c288], %55 {strides = array<i32>} : memref<2x512xf32, #tpu.memory_space<vmem>>, vector<2x16xf32>,
    %c0_80 = arith.constant 0 : index
    %c1_81 = arith.constant 1 : index
    %c3_82 = arith.constant 3 : index
    %c0_83 = arith.constant 0 : index
    %57 = vector.load %arg2[%c0_80, %c1_81, %c3_82, %c0_83] : memref<2x2x16x16xf32, #tpu.memory_space<vmem>>, vector<2x1x1x16xf32>
    %58 = vector.shape_cast %57 : vector<2x1x1x16xf32> to vector<2x16xf32>
    %c0_84 = arith.constant 0 : index
    %c304 = arith.constant 304 : index
    %59 = vector.load %arg3[%c0_84, %c304] : memref<2x512xf32, #tpu.memory_space<vmem>>, vector<2x16xf32>
    tpu.vector_store %arg3[%c0_84, %c304], %58 {strides = array<i32>} : memref<2x512xf32, #tpu.memory_space<vmem>>, vector<2x16xf32>,
    %c0_85 = arith.constant 0 : index
    %c1_86 = arith.constant 1 : index
    %c4_87 = arith.constant 4 : index
    %c0_88 = arith.constant 0 : index
    %60 = vector.load %arg2[%c0_85, %c1_86, %c4_87, %c0_88] : memref<2x2x16x16xf32, #tpu.memory_space<vmem>>, vector<2x1x1x16xf32>
    %61 = vector.shape_cast %60 : vector<2x1x1x16xf32> to vector<2x16xf32>
    %c0_89 = arith.constant 0 : index
    %c320 = arith.constant 320 : index
    %62 = vector.load %arg3[%c0_89, %c320] : memref<2x512xf32, #tpu.memory_space<vmem>>, vector<2x16xf32>
    tpu.vector_store %arg3[%c0_89, %c320], %61 {strides = array<i32>} : memref<2x512xf32, #tpu.memory_space<vmem>>, vector<2x16xf32>,
    %c0_90 = arith.constant 0 : index
    %c1_91 = arith.constant 1 : index
    %c5_92 = arith.constant 5 : index
    %c0_93 = arith.constant 0 : index
    %63 = vector.load %arg2[%c0_90, %c1_91, %c5_92, %c0_93] : memref<2x2x16x16xf32, #tpu.memory_space<vmem>>, vector<2x1x1x16xf32>
    %64 = vector.shape_cast %63 : vector<2x1x1x16xf32> to vector<2x16xf32>
    %c0_94 = arith.constant 0 : index
    %c336 = arith.constant 336 : index
    %65 = vector.load %arg3[%c0_94, %c336] : memref<2x512xf32, #tpu.memory_space<vmem>>, vector<2x16xf32>
    tpu.vector_store %arg3[%c0_94, %c336], %64 {strides = array<i32>} : memref<2x512xf32, #tpu.memory_space<vmem>>, vector<2x16xf32>,
    %c0_95 = arith.constant 0 : index
    %c1_96 = arith.constant 1 : index
    %c6_97 = arith.constant 6 : index
    %c0_98 = arith.constant 0 : index
    %66 = vector.load %arg2[%c0_95, %c1_96, %c6_97, %c0_98] : memref<2x2x16x16xf32, #tpu.memory_space<vmem>>, vector<2x1x1x16xf32>
    %67 = vector.shape_cast %66 : vector<2x1x1x16xf32> to vector<2x16xf32>
    %c0_99 = arith.constant 0 : index
    %c352 = arith.constant 352 : index
    %68 = vector.load %arg3[%c0_99, %c352] : memref<2x512xf32, #tpu.memory_space<vmem>>, vector<2x16xf32>
    tpu.vector_store %arg3[%c0_99, %c352], %67 {strides = array<i32>} : memref<2x512xf32, #tpu.memory_space<vmem>>, vector<2x16xf32>,
    %c0_100 = arith.constant 0 : index
    %c1_101 = arith.constant 1 : index
    %c7_102 = arith.constant 7 : index
    %c0_103 = arith.constant 0 : index
    %69 = vector.load %arg2[%c0_100, %c1_101, %c7_102, %c0_103] : memref<2x2x16x16xf32, #tpu.memory_space<vmem>>, vector<2x1x1x16xf32>
    %70 = vector.shape_cast %69 : vector<2x1x1x16xf32> to vector<2x16xf32>
    %c0_104 = arith.constant 0 : index
    %c368 = arith.constant 368 : index
    %71 = vector.load %arg3[%c0_104, %c368] : memref<2x512xf32, #tpu.memory_space<vmem>>, vector<2x16xf32>
    tpu.vector_store %arg3[%c0_104, %c368], %70 {strides = array<i32>} : memref<2x512xf32, #tpu.memory_space<vmem>>, vector<2x16xf32>,
    %c0_105 = arith.constant 0 : index
    %c1_106 = arith.constant 1 : index
    %c8_107 = arith.constant 8 : index
    %c0_108 = arith.constant 0 : index
    %72 = vector.load %arg2[%c0_105, %c1_106, %c8_107, %c0_108] : memref<2x2x16x16xf32, #tpu.memory_space<vmem>>, vector<2x1x1x16xf32>
    %73 = vector.shape_cast %72 : vector<2x1x1x16xf32> to vector<2x16xf32>
    %c0_109 = arith.constant 0 : index
    %c384 = arith.constant 384 : index
    %74 = vector.load %arg3[%c0_109, %c384] : memref<2x512xf32, #tpu.memory_space<vmem>>, vector<2x16xf32>
    tpu.vector_store %arg3[%c0_109, %c384], %73 {strides = array<i32>} : memref<2x512xf32, #tpu.memory_space<vmem>>, vector<2x16xf32>,
    %c0_110 = arith.constant 0 : index
    %c1_111 = arith.constant 1 : index
    %c9_112 = arith.constant 9 : index
    %c0_113 = arith.constant 0 : index
    %75 = vector.load %arg2[%c0_110, %c1_111, %c9_112, %c0_113] : memref<2x2x16x16xf32, #tpu.memory_space<vmem>>, vector<2x1x1x16xf32>
    %76 = vector.shape_cast %75 : vector<2x1x1x16xf32> to vector<2x16xf32>
    %c0_114 = arith.constant 0 : index
    %c400 = arith.constant 400 : index
    %77 = vector.load %arg3[%c0_114, %c400] : memref<2x512xf32, #tpu.memory_space<vmem>>, vector<2x16xf32>
    tpu.vector_store %arg3[%c0_114, %c400], %76 {strides = array<i32>} : memref<2x512xf32, #tpu.memory_space<vmem>>, vector<2x16xf32>,
    %c0_115 = arith.constant 0 : index
    %c1_116 = arith.constant 1 : index
    %c10_117 = arith.constant 10 : index
    %c0_118 = arith.constant 0 : index
    %78 = vector.load %arg2[%c0_115, %c1_116, %c10_117, %c0_118] : memref<2x2x16x16xf32, #tpu.memory_space<vmem>>, vector<2x1x1x16xf32>
    %79 = vector.shape_cast %78 : vector<2x1x1x16xf32> to vector<2x16xf32>
    %c0_119 = arith.constant 0 : index
    %c416 = arith.constant 416 : index
    %80 = vector.load %arg3[%c0_119, %c416] : memref<2x512xf32, #tpu.memory_space<vmem>>, vector<2x16xf32>
    tpu.vector_store %arg3[%c0_119, %c416], %79 {strides = array<i32>} : memref<2x512xf32, #tpu.memory_space<vmem>>, vector<2x16xf32>,
    %c0_120 = arith.constant 0 : index
    %c1_121 = arith.constant 1 : index
    %c11_122 = arith.constant 11 : index
    %c0_123 = arith.constant 0 : index
    %81 = vector.load %arg2[%c0_120, %c1_121, %c11_122, %c0_123] : memref<2x2x16x16xf32, #tpu.memory_space<vmem>>, vector<2x1x1x16xf32>
    %82 = vector.shape_cast %81 : vector<2x1x1x16xf32> to vector<2x16xf32>
    %c0_124 = arith.constant 0 : index
    %c432 = arith.constant 432 : index
    %83 = vector.load %arg3[%c0_124, %c432] : memref<2x512xf32, #tpu.memory_space<vmem>>, vector<2x16xf32>
    tpu.vector_store %arg3[%c0_124, %c432], %82 {strides = array<i32>} : memref<2x512xf32, #tpu.memory_space<vmem>>, vector<2x16xf32>,
    %c0_125 = arith.constant 0 : index
    %c1_126 = arith.constant 1 : index
    %c12_127 = arith.constant 12 : index
    %c0_128 = arith.constant 0 : index
    %84 = vector.load %arg2[%c0_125, %c1_126, %c12_127, %c0_128] : memref<2x2x16x16xf32, #tpu.memory_space<vmem>>, vector<2x1x1x16xf32>
    %85 = vector.shape_cast %84 : vector<2x1x1x16xf32> to vector<2x16xf32>
    %c0_129 = arith.constant 0 : index
    %c448 = arith.constant 448 : index
    %86 = vector.load %arg3[%c0_129, %c448] : memref<2x512xf32, #tpu.memory_space<vmem>>, vector<2x16xf32>
    tpu.vector_store %arg3[%c0_129, %c448], %85 {strides = array<i32>} : memref<2x512xf32, #tpu.memory_space<vmem>>, vector<2x16xf32>,
    %c0_130 = arith.constant 0 : index
    %c1_131 = arith.constant 1 : index
    %c13_132 = arith.constant 13 : index
    %c0_133 = arith.constant 0 : index
    %87 = vector.load %arg2[%c0_130, %c1_131, %c13_132, %c0_133] : memref<2x2x16x16xf32, #tpu.memory_space<vmem>>, vector<2x1x1x16xf32>
    %88 = vector.shape_cast %87 : vector<2x1x1x16xf32> to vector<2x16xf32>
    %c0_134 = arith.constant 0 : index
    %c464 = arith.constant 464 : index
    %89 = vector.load %arg3[%c0_134, %c464] : memref<2x512xf32, #tpu.memory_space<vmem>>, vector<2x16xf32>
    tpu.vector_store %arg3[%c0_134, %c464], %88 {strides = array<i32>} : memref<2x512xf32, #tpu.memory_space<vmem>>, vector<2x16xf32>,
    %c0_135 = arith.constant 0 : index
    %c1_136 = arith.constant 1 : index
    %c14_137 = arith.constant 14 : index
    %c0_138 = arith.constant 0 : index
    %90 = vector.load %arg2[%c0_135, %c1_136, %c14_137, %c0_138] : memref<2x2x16x16xf32, #tpu.memory_space<vmem>>, vector<2x1x1x16xf32>
    %91 = vector.shape_cast %90 : vector<2x1x1x16xf32> to vector<2x16xf32>
    %c0_139 = arith.constant 0 : index
    %c480 = arith.constant 480 : index
    %92 = vector.load %arg3[%c0_139, %c480] : memref<2x512xf32, #tpu.memory_space<vmem>>, vector<2x16xf32>
    tpu.vector_store %arg3[%c0_139, %c480], %91 {strides = array<i32>} : memref<2x512xf32, #tpu.memory_space<vmem>>, vector<2x16xf32>,
    %c0_140 = arith.constant 0 : index
    %c1_141 = arith.constant 1 : index
    %c15_142 = arith.constant 15 : index
    %c0_143 = arith.constant 0 : index
    %93 = vector.load %arg2[%c0_140, %c1_141, %c15_142, %c0_143] : memref<2x2x16x16xf32, #tpu.memory_space<vmem>>, vector<2x1x1x16xf32>
    %94 = vector.shape_cast %93 : vector<2x1x1x16xf32> to vector<2x16xf32>
    %c0_144 = arith.constant 0 : index
    %c496 = arith.constant 496 : index
    %95 = vector.load %arg3[%c0_144, %c496] : memref<2x512xf32, #tpu.memory_space<vmem>>, vector<2x16xf32>
    tpu.vector_store %arg3[%c0_144, %c496], %94 {strides = array<i32>} : memref<2x512xf32, #tpu.memory_space<vmem>>, vector<2x16xf32>,
    return
  }
  func.func @transform_0(%arg0: i32, %arg1: i32) -> (i32, i32, i32, i32) {
    %c0_i32 = arith.constant 0 : i32
    %c0_i32_0 = arith.constant 0 : i32
    %c0_i32_1 = arith.constant 0 : i32
    return %arg0, %arg1, %c0_i32, %c0_i32_0 : i32, i32, i32, i32
  }
  func.func @transform_1(%arg0: i32, %arg1: i32) -> (i32, i32) {
    %c0_i32 = arith.constant 0 : i32
    return %arg0, %arg1 : i32, i32
  }
}

</mosaic_0001>

<llo_original>
// kernel: linear_view.1
$region0: #{linear_view.1}
  #allocation0 [shape = 'u32[]', space=smem, size = 0x4, offset = 0x4, fixed_abs, tag = 'smem constant byte address 0x4 - core index']
  #allocation1 [shape = 'u32[144,128]{1,0:T(1,128)}', space=vmem, size = 0x12000, scoped, tag = 'internal scratch']
  #allocation6 [shape = 's32[]', space=sflag, size = 0x4, offset = 0, fixed_abs, tag = 'sflag constant byte address 0x0 - dummy sync flag']
  %s0 = inlined_call_operand.hbm [shape: f32[2,4,16,16], index: 0, kind: input, shape index: {}]
  %s1 = inlined_call_operand.hbm [shape: f32[2,1024], index: 1, kind: output, shape index: {}]
  %s2 = sld [smem:[#allocation0]]
  $region41: #{linear_view.1} parent=0
    _
  %s4 = ssub.s32 1, %s2
  %s5 = scalar_select 0, %s4, %s2
  $region1: #{linear_view.1} parent=0
    #allocation2 [shape = 'u8[65536]{0}', space=vmem, size = 0x10000, scoped, tag = 'input window, operand 0']
    #allocation3 [shape = 's32[2]{0}', space=sflag, size = 0x8, scoped, tag = 'scoped memory for linear_view.1']
    #allocation4 [shape = 's32[2]{0}', space=sflag, size = 0x8, scoped, tag = 'scoped memory for linear_view.1']
    #allocation5 [shape = 'u8[8192]{0}', space=vmem, size = 0x2000, scoped, tag = 'output window, operand 0']
    %6 = vsyncpa [#allocation3], 0
    %s7 = scalar_lea.sflag [#allocation3], 1
    %8 = vsyncpa %s7, 0
    %9 = vsyncpa [#allocation4], 0
    %s10 = scalar_lea.sflag [#allocation4], 1
    %11 = vsyncpa %s10, 0
    loop: start=0, step=1, limit=4
    $region2: #{linear_view.1} parent=1 // loop_pre_header
      _
    $region3: #{linear_view.1} parent=1 // loop_header
      %s13 = sphi 0, %s17
      %p14 = scmp.ge.s32.totalorder %s13, 4
      %s20 = sphi 0, %s32
      %s21 = sphi 0, %s28
      %s22 = sphi 0, %s20
      %s23 = sphi 0, %s21
      %s24 = sphi 0, %s22
      %s25 = sphi 0, %s23
      %s37 = sphi 0, %s39
      %s40 = sphi 0, %s37
      %s41 = sphi 0, %s40
      %s57 = sphi 0, %s41
      %s65 = sphi 0, %s67
      %s68 = sphi 0, %s65
      %s69 = sphi 0, %s68
      %s85 = sphi 0, %s69
    $region4: #{linear_view.1} parent=1 // loop_header_branch
      %16 = sbr.rel (%p14) target = $region8
    $region5: #{linear_view.1} parent=1 // loop_body
      %s18 = ssub.s32 %s13, 1
      %s19 = ssub.s32 %s13, 2
      %s26 = sadd.s32 1, %s21
      %p27 = scmp.ge.s32.totalorder %s26, 2
      %s28 = scalar_select %p27, 0, %s26
      %s29 = sadd.s32 1, %s20
      %s30 = scalar_select %p27, %s29, %s20
      %p31 = scmp.ge.s32.totalorder %s30, 1
      %s32 = scalar_select %p31, 0, %s30
      %s33 = ssub.s32 %s20, %s32
      %s34 = ssub.s32 %s21, %s28
      %s35 = sor.u32 %s33, %s34
      %p36 = scmp.eq.s32.totalorder %s35, 0
      %s38 = sadd.s32 %s37, 1
      %s39 = scalar_select %p36, %s37, %s38
      %p42 = pneg %p36
      %p43 = scmp.eq.s32.totalorder %s13, 1
      %p44 = por %p42, %p43
      %p45 = scmp.ne.s32.totalorder %s37, %s40
      %p46 = scmp.eq.s32.totalorder %s13, 0
      %p47 = por %p45, %p46
      %p48 = scmp.ne.s32.totalorder %s37, %s40
      %p49 = scmp.eq.s32.totalorder %s18, 1
      %p50 = por %p48, %p49
      %p51 = scmp.ne.s32.totalorder %s40, %s41
      %p52 = scmp.eq.s32.totalorder %s18, 0
      %p53 = por %p51, %p52
      %p54 = scmp.ne.s32.totalorder %s40, %s41
      %p55 = scmp.eq.s32.totalorder %s19, 1
      %p56 = por %p54, %p55
      %p58 = scmp.ne.s32.totalorder %s41, %s57
      %p59 = scmp.eq.s32.totalorder %s19, 0
      %p60 = por %p58, %p59
      %s61 = ssub.s32 %s20, %s32
      %s62 = ssub.s32 %s21, %s28
      %s63 = sor.u32 %s61, %s62
      %p64 = scmp.eq.s32.totalorder %s63, 0
      %s66 = sadd.s32 %s65, 1
      %s67 = scalar_select %p64, %s65, %s66
      %p70 = pneg %p64
      %p71 = scmp.eq.s32.totalorder %s13, 1
      %p72 = por %p70, %p71
      %p73 = scmp.ne.s32.totalorder %s65, %s68
      %p74 = scmp.eq.s32.totalorder %s13, 0
      %p75 = por %p73, %p74
      %p76 = scmp.ne.s32.totalorder %s65, %s68
      %p77 = scmp.eq.s32.totalorder %s18, 1
      %p78 = por %p76, %p77
      %p79 = scmp.ne.s32.totalorder %s68, %s69
      %p80 = scmp.eq.s32.totalorder %s18, 0
      %p81 = por %p79, %p80
      %p82 = scmp.ne.s32.totalorder %s68, %s69
      %p83 = scmp.eq.s32.totalorder %s19, 1
      %p84 = por %p82, %p83
      %p86 = scmp.ne.s32.totalorder %s69, %s85
      %p87 = scmp.eq.s32.totalorder %s19, 0
      %p88 = por %p86, %p87
      %p89 = scmp.le.s32.totalorder 1, %s13
      %p90 = scmp.lt.s32.totalorder %s13, 3
      %p91 = pnand %p89, %p90
      %p92 = pneg %p91
      // Predicated region
      $region9: #{linear_view.1} parent=5 // pred_check
        _
      $region10: #{linear_view.1} parent=5 // pred_check_branch
        %94 = sbr.rel (%p91) target = $region12
      $region11: #{linear_view.1} parent=5 // pred_region
        %s95 = ssub.s32 %s13, 1
      $region12: #{linear_view.1} parent=5 // pred_fallthru
        _
      %p96 = scmp.lt.s32.totalorder %s13, 2
      // Predicated region
      $region13: #{linear_view.1} parent=5 // pred_check
        %p97 = pneg %p96
      $region14: #{linear_view.1} parent=5 // pred_check_branch
        %99 = sbr.rel (%p97) target = $region16
      $region15: #{linear_view.1} parent=5 // pred_region
        // Predicated region
        $region17: #{linear_view.1} parent=15 // pred_check
          %p100 = pneg %p47
        $region18: #{linear_view.1} parent=15 // pred_check_branch
          %102 = sbr.rel (%p100) target = $region20
        $region19: #{linear_view.1} parent=15 // pred_region
          #allocation7 [shape = 'u32[6]{0}', space=smem, size = 0x18, scoped, tag = 'DMA stride descriptor']
          %s103 = sand.u32 %s37, 1
          %s104 = scalar_lea.sflag [#allocation3], %s103
          %s105 = sand.u32 %s37, 1
          %s106 = smul.addr %s105, 64
          %s107 = scalar_lea.vmem [#allocation2], %s106
          %s108 = smul.u32 2, %s20
          %s109 = smul.u32 2, %s21
          %s111 = ssub.s32 1024, 1024
          %112 = vsyncadd %s104, %s111
          %s113 = smul.addr %s109, 2
          %s114 = smul.addr %s108, 8
          %s115 = sadd.s32 %s113, %s114
          %s116 = smul.addr %s115, 128
          %s117 = scalar_lea.hbm %s0, %s116
          %s119 = sshll.u32 1, 14
          %s120 = sxor.u32 4294967295, %s119
          %s122 = sld [smem:[#allocation0]]
          %s123 = sadd.s32 2, %s122
          %s125 = sshll.u32 7, 26
          %s126 = sxor.u32 4294967295, %s125
          %s127 = sand.u32 0, %s126
          %s128 = sshll.u32 %s123, 26
          %s129 = sor.u32 %s127, %s128
          %s130 = sshll.u32 %s107, 4
          %s131 = int_to_ptr.vmem [resolvable:$true] %s130
          %137 = sst [smem:[#allocation7]] 1024
          %s138 = scalar_lea.smem [#allocation7], 1
          %139 = sst [smem:[%s138]] 512
          %s140 = scalar_lea.smem [#allocation7], 2
          %141 = sst [smem:[%s140]] 4
          %s142 = scalar_lea.smem [#allocation7], 3
          %143 = sst [smem:[%s142]] 128
          %s144 = scalar_lea.smem [#allocation7], 4
          %145 = sst [smem:[%s144]] 128
          %s146 = scalar_lea.smem [#allocation7], 5
          %147 = sst [smem:[%s146]] 8
          %149 = dma.general %s117, 1024, %s131, %s104, 131072, [#allocation7], %s129, 0
        $region20: #{linear_view.1} parent=15 // pred_fallthru
          _
      $region16: #{linear_view.1} parent=5 // pred_fallthru
        _
      %p150 = scmp.le.s32.totalorder 1, %s13
      %p151 = scmp.lt.s32.totalorder %s13, 3
      %p152 = pnand %p150, %p151
      %p153 = pneg %p152
      // Predicated region
      $region21: #{linear_view.1} parent=5 // pred_check
        _
      $region22: #{linear_view.1} parent=5 // pred_check_branch
        %155 = sbr.rel (%p152) target = $region24
      $region23: #{linear_view.1} parent=5 // pred_region
        %s156 = ssub.s32 %s13, 1
        %s157 = sand.u32 %s40, 1
        %s158 = scalar_lea.sflag [#allocation3], %s157
        %s159 = sand.u32 %s40, 1
        %s160 = smul.addr %s159, 64
        %s161 = scalar_lea.vmem [#allocation2], %s160
        // Predicated region
        $region25: #{linear_view.1} parent=23 // pred_check
          %p162 = pneg %p53
        $region26: #{linear_view.1} parent=23 // pred_check_branch
          %164 = sbr.rel (%p162) target = $region28
        $region27: #{linear_view.1} parent=23 // pred_region
          %165 = dma.done %s158, 1024
        $region28: #{linear_view.1} parent=23 // pred_fallthru
          _
        %s166 = sand.u32 %s40, 1
        %s167 = scalar_lea.sflag [#allocation3], %s166
        %s168 = sand.u32 %s40, 1
        %s169 = smul.addr %s168, 64
        %s170 = scalar_lea.vmem [#allocation2], %s169
        %p171 = pneg %p53
        %p172 = pneg %p50
        %p173 = pneg %p81
        %p174 = pneg %p78
        %s175 = sand.u32 %s68, 1
        %s176 = scalar_lea.sflag [#allocation4], %s175
        %s177 = sand.u32 %s68, 1
        %s178 = smul.addr %s177, 8
        %s179 = scalar_lea.vmem [#allocation5], %s178
        %s180 = smul.u32 2, %s22
        %s181 = smul.u32 2, %s23
        %s182 = smul.u32 4, %s23
        %v183 = vld [vmem:[%s161] sm:$0x1]
        %v184 = vld [vmem:[%s161 + $0x20] sm:$0x1]
        %v188 = vunpack.c.l.s4 1983009808
        %v189 = vunpack.c.0.s8 %v188
        %v190 = vlaneseq
        %v191 = vshrl.u32 %v190, 7
        %v192 = vsub.s32 %v189, %v191
        %v193 = vrot.slane %v183, %v192
        %v195 = vunpack.c.l.s4 1983009808
        %v196 = vunpack.c.0.s8 %v195
        %v197 = vlaneseq
        %v198 = vshrl.u32 %v197, 7
        %v199 = vsub.s32 %v196, %v198
        %v200 = vrot.slane %v184, %v199
        %vm201 = vcmask 1044484
        %v202 = vsel %vm201, %v193, %v193
        %vm203 = vcmask 1046534
        %v204 = vsel %vm203, %v193, %v202
        %v205 = vrot.slane %v200, 7
        %vm206 = vcmask 1041409
        %v207 = vsel %vm206, %v205, %v204
        %vm208 = vcmask 1043459
        %v209 = vsel %vm208, %v205, %v207
        %vm210 = vcmask 1045509
        %v211 = vsel %vm210, %v205, %v209
        %vm212 = vcmask 1047559
        %v213 = vsel %vm212, %v205, %v211
        %vm215 = vcmask 123904
        %216 = vst.msk [vmem:[%s179] sm:$0x3] %vm215, %v213
        %v217 = vld [vmem:[%s161 + $0x1] sm:$0x1]
        %v218 = vld [vmem:[%s161 + $0x21] sm:$0x1]
        %v222 = vunpack.c.l.s4 1983009808
        %v223 = vunpack.c.0.s8 %v222
        %v224 = vlaneseq
        %v225 = vshrl.u32 %v224, 7
        %v226 = vsub.s32 %v223, %v225
        %v227 = vrot.slane %v217, %v226
        %v229 = vunpack.c.l.s4 1983009808
        %v230 = vunpack.c.0.s8 %v229
        %v231 = vlaneseq
        %v232 = vshrl.u32 %v231, 7
        %v233 = vsub.s32 %v230, %v232
        %v234 = vrot.slane %v218, %v233
        %v235 = vsel %vm201, %v227, %v227
        %v236 = vsel %vm203, %v227, %v235
        %v237 = vrot.slane %v234, 7
        %v238 = vsel %vm206, %v237, %v236
        %v239 = vsel %vm208, %v237, %v238
        %v240 = vsel %vm210, %v237, %v239
        %v241 = vsel %vm212, %v237, %v240
        %242 = vrot.lane.b32.xlu0 %v241, 16
        %v243 = vpop.permute.xlu0 %242
        %vm245 = vcmask 255104
        %246 = vst.msk [vmem:[%s179] sm:$0x3] %vm245, %v243
        %v247 = vld [vmem:[%s161 + $0x2] sm:$0x1]
        %v248 = vld [vmem:[%s161 + $0x22] sm:$0x1]
        %v252 = vunpack.c.l.s4 1983009808
        %v253 = vunpack.c.0.s8 %v252
        %v254 = vlaneseq
        %v255 = vshrl.u32 %v254, 7
        %v256 = vsub.s32 %v253, %v255
        %v257 = vrot.slane %v247, %v256
        %v259 = vunpack.c.l.s4 1983009808
        %v260 = vunpack.c.0.s8 %v259
        %v261 = vlaneseq
        %v262 = vshrl.u32 %v261, 7
        %v263 = vsub.s32 %v260, %v262
        %v264 = vrot.slane %v248, %v263
        %v265 = vsel %vm201, %v257, %v257
        %v266 = vsel %vm203, %v257, %v265
        %v267 = vrot.slane %v264, 7
        %v268 = vsel %vm206, %v267, %v266
        %v269 = vsel %vm208, %v267, %v268
        %v270 = vsel %vm210, %v267, %v269
        %v271 = vsel %vm212, %v267, %v270
        %272 = vrot.lane.b32.xlu0 %v271, 32
        %v273 = vpop.permute.xlu0 %272
        %vm275 = vcmask 386304
        %276 = vst.msk [vmem:[%s179] sm:$0x3] %vm275, %v273
        %v277 = vld [vmem:[%s161 + $0x3] sm:$0x1]
        %v278 = vld [vmem:[%s161 + $0x23] sm:$0x1]
        %v282 = vunpack.c.l.s4 1983009808
        %v283 = vunpack.c.0.s8 %v282
        %v284 = vlaneseq
        %v285 = vshrl.u32 %v284, 7
        %v286 = vsub.s32 %v283, %v285
        %v287 = vrot.slane %v277, %v286
        %v289 = vunpack.c.l.s4 1983009808
        %v290 = vunpack.c.0.s8 %v289
        %v291 = vlaneseq
        %v292 = vshrl.u32 %v291, 7
        %v293 = vsub.s32 %v290, %v292
        %v294 = vrot.slane %v278, %v293
        %v295 = vsel %vm201, %v287, %v287
        %v296 = vsel %vm203, %v287, %v295
        %v297 = vrot.slane %v294, 7
        %v298 = vsel %vm206, %v297, %v296
        %v299 = vsel %vm208, %v297, %v298
        %v300 = vsel %vm210, %v297, %v299
        %v301 = vsel %vm212, %v297, %v300
        %302 = vrot.lane.b32.xlu0 %v301, 48
        %v303 = vpop.permute.xlu0 %302
        %vm305 = vcmask 517504
        %306 = vst.msk [vmem:[%s179] sm:$0x3] %vm305, %v303
        %v307 = vld [vmem:[%s161 + $0x4] sm:$0x1]
        %v308 = vld [vmem:[%s161 + $0x24] sm:$0x1]
        %v312 = vunpack.c.l.s4 1983009808
        %v313 = vunpack.c.0.s8 %v312
        %v314 = vlaneseq
        %v315 = vshrl.u32 %v314, 7
        %v316 = vsub.s32 %v313, %v315
        %v317 = vrot.slane %v307, %v316
        %v319 = vunpack.c.l.s4 1983009808
        %v320 = vunpack.c.0.s8 %v319
        %v321 = vlaneseq
        %v322 = vshrl.u32 %v321, 7
        %v323 = vsub.s32 %v320, %v322
        %v324 = vrot.slane %v308, %v323
        %v325 = vsel %vm201, %v317, %v317
        %v326 = vsel %vm203, %v317, %v325
        %v327 = vrot.slane %v324, 7
        %v328 = vsel %vm206, %v327, %v326
        %v329 = vsel %vm208, %v327, %v328
        %v330 = vsel %vm210, %v327, %v329
        %v331 = vsel %vm212, %v327, %v330
        %332 = vrot.lane.b32.xlu0 %v331, 64
        %v333 = vpop.permute.xlu0 %332
        %vm335 = vcmask 648704
        %336 = vst.msk [vmem:[%s179] sm:$0x3] %vm335, %v333
        %v337 = vld [vmem:[%s161 + $0x5] sm:$0x1]
        %v338 = vld [vmem:[%s161 + $0x25] sm:$0x1]
        %v342 = vunpack.c.l.s4 1983009808
        %v343 = vunpack.c.0.s8 %v342
        %v344 = vlaneseq
        %v345 = vshrl.u32 %v344, 7
        %v346 = vsub.s32 %v343, %v345
        %v347 = vrot.slane %v337, %v346
        %v349 = vunpack.c.l.s4 1983009808
        %v350 = vunpack.c.0.s8 %v349
        %v351 = vlaneseq
        %v352 = vshrl.u32 %v351, 7
        %v353 = vsub.s32 %v350, %v352
        %v354 = vrot.slane %v338, %v353
        %v355 = vsel %vm201, %v347, %v347
        %v356 = vsel %vm203, %v347, %v355
        %v357 = vrot.slane %v354, 7
        %v358 = vsel %vm206, %v357, %v356
        %v359 = vsel %vm208, %v357, %v358
        %v360 = vsel %vm210, %v357, %v359
        %v361 = vsel %vm212, %v357, %v360
        %362 = vrot.lane.b32.xlu0 %v361, 80
        %v363 = vpop.permute.xlu0 %362
        %vm365 = vcmask 779904
        %366 = vst.msk [vmem:[%s179] sm:$0x3] %vm365, %v363
        %v367 = vld [vmem:[%s161 + $0x6] sm:$0x1]
        %v368 = vld [vmem:[%s161 + $0x26] sm:$0x1]
        %v372 = vunpack.c.l.s4 1983009808
        %v373 = vunpack.c.0.s8 %v372
        %v374 = vlaneseq
        %v375 = vshrl.u32 %v374, 7
        %v376 = vsub.s32 %v373, %v375
        %v377 = vrot.slane %v367, %v376
        %v379 = vunpack.c.l.s4 1983009808
        %v380 = vunpack.c.0.s8 %v379
        %v381 = vlaneseq
        %v382 = vshrl.u32 %v381, 7
        %v383 = vsub.s32 %v380, %v382
        %v384 = vrot.slane %v368, %v383
        %v385 = vsel %vm201, %v377, %v377
        %v386 = vsel %vm203, %v377, %v385
        %v387 = vrot.slane %v384, 7
        %v388 = vsel %vm206, %v387, %v386
        %v389 = vsel %vm208, %v387, %v388
        %v390 = vsel %vm210, %v387, %v389
        %v391 = vsel %vm212, %v387, %v390
        %392 = vrot.lane.b32.xlu0 %v391, 96
        %v393 = vpop.permute.xlu0 %392
        %vm395 = vcmask 911104
        %396 = vst.msk [vmem:[%s179] sm:$0x3] %vm395, %v393
        %v397 = vld [vmem:[%s161 + $0x7] sm:$0x1]
        %v398 = vld [vmem:[%s161 + $0x27] sm:$0x1]
        %v402 = vunpack.c.l.s4 1983009808
        %v403 = vunpack.c.0.s8 %v402
        %v404 = vlaneseq
        %v405 = vshrl.u32 %v404, 7
        %v406 = vsub.s32 %v403, %v405
        %v407 = vrot.slane %v397, %v406
        %v409 = vunpack.c.l.s4 1983009808
        %v410 = vunpack.c.0.s8 %v409
        %v411 = vlaneseq
        %v412 = vshrl.u32 %v411, 7
        %v413 = vsub.s32 %v410, %v412
        %v414 = vrot.slane %v398, %v413
        %v415 = vsel %vm201, %v407, %v407
        %v416 = vsel %vm203, %v407, %v415
        %v417 = vrot.slane %v414, 7
        %v418 = vsel %vm206, %v417, %v416
        %v419 = vsel %vm208, %v417, %v418
        %v420 = vsel %vm210, %v417, %v419
        %v421 = vsel %vm212, %v417, %v420
        %422 = vrot.lane.b32.xlu0 %v421, 112
        %v423 = vpop.permute.xlu0 %422
        %vm425 = vcmask 1042304
        %426 = vst.msk [vmem:[%s179] sm:$0x3] %vm425, %v423
        %v427 = vld [vmem:[%s161 + $0x8] sm:$0x1]
        %v428 = vld [vmem:[%s161 + $0x28] sm:$0x1]
        %v432 = vunpack.c.l.s4 1983009808
        %v433 = vunpack.c.0.s8 %v432
        %v434 = vlaneseq
        %v435 = vshrl.u32 %v434, 7
        %v436 = vsub.s32 %v433, %v435
        %v437 = vrot.slane %v427, %v436
        %v439 = vunpack.c.l.s4 1983009808
        %v440 = vunpack.c.0.s8 %v439
        %v441 = vlaneseq
        %v442 = vshrl.u32 %v441, 7
        %v443 = vsub.s32 %v440, %v442
        %v444 = vrot.slane %v428, %v443
        %v445 = vsel %vm201, %v437, %v437
        %v446 = vsel %vm203, %v437, %v445
        %v447 = vrot.slane %v444, 7
        %v448 = vsel %vm206, %v447, %v446
        %v449 = vsel %vm208, %v447, %v448
        %v450 = vsel %vm210, %v447, %v449
        %v451 = vsel %vm212, %v447, %v450
        %453 = vst.msk [vmem:[%s179 + $0x2] sm:$0x3] %vm215, %v451
        %v454 = vld [vmem:[%s161 + $0x9] sm:$0x1]
        %v455 = vld [vmem:[%s161 + $0x29] sm:$0x1]
        %v459 = vunpack.c.l.s4 1983009808
        %v460 = vunpack.c.0.s8 %v459
        %v461 = vlaneseq
        %v462 = vshrl.u32 %v461, 7
        %v463 = vsub.s32 %v460, %v462
        %v464 = vrot.slane %v454, %v463
        %v466 = vunpack.c.l.s4 1983009808
        %v467 = vunpack.c.0.s8 %v466
        %v468 = vlaneseq
        %v469 = vshrl.u32 %v468, 7
        %v470 = vsub.s32 %v467, %v469
        %v471 = vrot.slane %v455, %v470
        %v472 = vsel %vm201, %v464, %v464
        %v473 = vsel %vm203, %v464, %v472
        %v474 = vrot.slane %v471, 7
        %v475 = vsel %vm206, %v474, %v473
        %v476 = vsel %vm208, %v474, %v475
        %v477 = vsel %vm210, %v474, %v476
        %v478 = vsel %vm212, %v474, %v477
        %479 = vrot.lane.b32.xlu0 %v478, 16
        %v480 = vpop.permute.xlu0 %479
        %482 = vst.msk [vmem:[%s179 + $0x2] sm:$0x3] %vm245, %v480
        %v483 = vld [vmem:[%s161 + $0xa] sm:$0x1]
        %v484 = vld [vmem:[%s161 + $0x2a] sm:$0x1]
        %v488 = vunpack.c.l.s4 1983009808
        %v489 = vunpack.c.0.s8 %v488
        %v490 = vlaneseq
        %v491 = vshrl.u32 %v490, 7
        %v492 = vsub.s32 %v489, %v491
        %v493 = vrot.slane %v483, %v492
        %v495 = vunpack.c.l.s4 1983009808
        %v496 = vunpack.c.0.s8 %v495
        %v497 = vlaneseq
        %v498 = vshrl.u32 %v497, 7
        %v499 = vsub.s32 %v496, %v498
        %v500 = vrot.slane %v484, %v499
        %v501 = vsel %vm201, %v493, %v493
        %v502 = vsel %vm203, %v493, %v501
        %v503 = vrot.slane %v500, 7
        %v504 = vsel %vm206, %v503, %v502
        %v505 = vsel %vm208, %v503, %v504
        %v506 = vsel %vm210, %v503, %v505
        %v507 = vsel %vm212, %v503, %v506
        %508 = vrot.lane.b32.xlu0 %v507, 32
        %v509 = vpop.permute.xlu0 %508
        %511 = vst.msk [vmem:[%s179 + $0x2] sm:$0x3] %vm275, %v509
        %v512 = vld [vmem:[%s161 + $0xb] sm:$0x1]
        %v513 = vld [vmem:[%s161 + $0x2b] sm:$0x1]
        %v517 = vunpack.c.l.s4 1983009808
        %v518 = vunpack.c.0.s8 %v517
        %v519 = vlaneseq
        %v520 = vshrl.u32 %v519, 7
        %v521 = vsub.s32 %v518, %v520
        %v522 = vrot.slane %v512, %v521
        %v524 = vunpack.c.l.s4 1983009808
        %v525 = vunpack.c.0.s8 %v524
        %v526 = vlaneseq
        %v527 = vshrl.u32 %v526, 7
        %v528 = vsub.s32 %v525, %v527
        %v529 = vrot.slane %v513, %v528
        %v530 = vsel %vm201, %v522, %v522
        %v531 = vsel %vm203, %v522, %v530
        %v532 = vrot.slane %v529, 7
        %v533 = vsel %vm206, %v532, %v531
        %v534 = vsel %vm208, %v532, %v533
        %v535 = vsel %vm210, %v532, %v534
        %v536 = vsel %vm212, %v532, %v535
        %537 = vrot.lane.b32.xlu0 %v536, 48
        %v538 = vpop.permute.xlu0 %537
        %540 = vst.msk [vmem:[%s179 + $0x2] sm:$0x3] %vm305, %v538
        %v541 = vld [vmem:[%s161 + $0xc] sm:$0x1]
        %v542 = vld [vmem:[%s161 + $0x2c] sm:$0x1]
        %v546 = vunpack.c.l.s4 1983009808
        %v547 = vunpack.c.0.s8 %v546
        %v548 = vlaneseq
        %v549 = vshrl.u32 %v548, 7
        %v550 = vsub.s32 %v547, %v549
        %v551 = vrot.slane %v541, %v550
        %v553 = vunpack.c.l.s4 1983009808
        %v554 = vunpack.c.0.s8 %v553
        %v555 = vlaneseq
        %v556 = vshrl.u32 %v555, 7
        %v557 = vsub.s32 %v554, %v556
        %v558 = vrot.slane %v542, %v557
        %v559 = vsel %vm201, %v551, %v551
        %v560 = vsel %vm203, %v551, %v559
        %v561 = vrot.slane %v558, 7
        %v562 = vsel %vm206, %v561, %v560
        %v563 = vsel %vm208, %v561, %v562
        %v564 = vsel %vm210, %v561, %v563
        %v565 = vsel %vm212, %v561, %v564
        %566 = vrot.lane.b32.xlu0 %v565, 64
        %v567 = vpop.permute.xlu0 %566
        %569 = vst.msk [vmem:[%s179 + $0x2] sm:$0x3] %vm335, %v567
        %v570 = vld [vmem:[%s161 + $0xd] sm:$0x1]
        %v571 = vld [vmem:[%s161 + $0x2d] sm:$0x1]
        %v575 = vunpack.c.l.s4 1983009808
        %v576 = vunpack.c.0.s8 %v575
        %v577 = vlaneseq
        %v578 = vshrl.u32 %v577, 7
        %v579 = vsub.s32 %v576, %v578
        %v580 = vrot.slane %v570, %v579
        %v582 = vunpack.c.l.s4 1983009808
        %v583 = vunpack.c.0.s8 %v582
        %v584 = vlaneseq
        %v585 = vshrl.u32 %v584, 7
        %v586 = vsub.s32 %v583, %v585
        %v587 = vrot.slane %v571, %v586
        %v588 = vsel %vm201, %v580, %v580
        %v589 = vsel %vm203, %v580, %v588
        %v590 = vrot.slane %v587, 7
        %v591 = vsel %vm206, %v590, %v589
        %v592 = vsel %vm208, %v590, %v591
        %v593 = vsel %vm210, %v590, %v592
        %v594 = vsel %vm212, %v590, %v593
        %595 = vrot.lane.b32.xlu0 %v594, 80
        %v596 = vpop.permute.xlu0 %595
        %598 = vst.msk [vmem:[%s179 + $0x2] sm:$0x3] %vm365, %v596
        %v599 = vld [vmem:[%s161 + $0xe] sm:$0x1]
        %v600 = vld [vmem:[%s161 + $0x2e] sm:$0x1]
        %v604 = vunpack.c.l.s4 1983009808
        %v605 = vunpack.c.0.s8 %v604
        %v606 = vlaneseq
        %v607 = vshrl.u32 %v606, 7
        %v608 = vsub.s32 %v605, %v607
        %v609 = vrot.slane %v599, %v608
        %v611 = vunpack.c.l.s4 1983009808
        %v612 = vunpack.c.0.s8 %v611
        %v613 = vlaneseq
        %v614 = vshrl.u32 %v613, 7
        %v615 = vsub.s32 %v612, %v614
        %v616 = vrot.slane %v600, %v615
        %v617 = vsel %vm201, %v609, %v609
        %v618 = vsel %vm203, %v609, %v617
        %v619 = vrot.slane %v616, 7
        %v620 = vsel %vm206, %v619, %v618
        %v621 = vsel %vm208, %v619, %v620
        %v622 = vsel %vm210, %v619, %v621
        %v623 = vsel %vm212, %v619, %v622
        %624 = vrot.lane.b32.xlu0 %v623, 96
        %v625 = vpop.permute.xlu0 %624
        %627 = vst.msk [vmem:[%s179 + $0x2] sm:$0x3] %vm395, %v625
        %v628 = vld [vmem:[%s161 + $0xf] sm:$0x1]
        %v629 = vld [vmem:[%s161 + $0x2f] sm:$0x1]
        %v633 = vunpack.c.l.s4 1983009808
        %v634 = vunpack.c.0.s8 %v633
        %v635 = vlaneseq
        %v636 = vshrl.u32 %v635, 7
        %v637 = vsub.s32 %v634, %v636
        %v638 = vrot.slane %v628, %v637
        %v640 = vunpack.c.l.s4 1983009808
        %v641 = vunpack.c.0.s8 %v640
        %v642 = vlaneseq
        %v643 = vshrl.u32 %v642, 7
        %v644 = vsub.s32 %v641, %v643
        %v645 = vrot.slane %v629, %v644
        %v646 = vsel %vm201, %v638, %v638
        %v647 = vsel %vm203, %v638, %v646
        %v648 = vrot.slane %v645, 7
        %v649 = vsel %vm206, %v648, %v647
        %v650 = vsel %vm208, %v648, %v649
        %v651 = vsel %vm210, %v648, %v650
        %v652 = vsel %vm212, %v648, %v651
        %653 = vrot.lane.b32.xlu0 %v652, 112
        %v654 = vpop.permute.xlu0 %653
        %656 = vst.msk [vmem:[%s179 + $0x2] sm:$0x3] %vm425, %v654
        %s657 = scalar_lea.vmem %s161, 16 [#allocation2]
        %v658 = vld [vmem:[%s657] sm:$0x1]
        %v659 = vld [vmem:[%s657 + $0x20] sm:$0x1]
        %v663 = vunpack.c.l.s4 1983009808
        %v664 = vunpack.c.0.s8 %v663
        %v665 = vlaneseq
        %v666 = vshrl.u32 %v665, 7
        %v667 = vsub.s32 %v664, %v666
        %v668 = vrot.slane %v658, %v667
        %v670 = vunpack.c.l.s4 1983009808
        %v671 = vunpack.c.0.s8 %v670
        %v672 = vlaneseq
        %v673 = vshrl.u32 %v672, 7
        %v674 = vsub.s32 %v671, %v673
        %v675 = vrot.slane %v659, %v674
        %v676 = vsel %vm201, %v668, %v668
        %v677 = vsel %vm203, %v668, %v676
        %v678 = vrot.slane %v675, 7
        %v679 = vsel %vm206, %v678, %v677
        %v680 = vsel %vm208, %v678, %v679
        %v681 = vsel %vm210, %v678, %v680
        %v682 = vsel %vm212, %v678, %v681
        %684 = vst.msk [vmem:[%s179 + $0x4] sm:$0x3] %vm215, %v682
        %v685 = vld [vmem:[%s657 + $0x1] sm:$0x1]
        %v686 = vld [vmem:[%s657 + $0x21] sm:$0x1]
        %v690 = vunpack.c.l.s4 1983009808
        %v691 = vunpack.c.0.s8 %v690
        %v692 = vlaneseq
        %v693 = vshrl.u32 %v692, 7
        %v694 = vsub.s32 %v691, %v693
        %v695 = vrot.slane %v685, %v694
        %v697 = vunpack.c.l.s4 1983009808
        %v698 = vunpack.c.0.s8 %v697
        %v699 = vlaneseq
        %v700 = vshrl.u32 %v699, 7
        %v701 = vsub.s32 %v698, %v700
        %v702 = vrot.slane %v686, %v701
        %v703 = vsel %vm201, %v695, %v695
        %v704 = vsel %vm203, %v695, %v703
        %v705 = vrot.slane %v702, 7
        %v706 = vsel %vm206, %v705, %v704
        %v707 = vsel %vm208, %v705, %v706
        %v708 = vsel %vm210, %v705, %v707
        %v709 = vsel %vm212, %v705, %v708
        %710 = vrot.lane.b32.xlu0 %v709, 16
        %v711 = vpop.permute.xlu0 %710
        %713 = vst.msk [vmem:[%s179 + $0x4] sm:$0x3] %vm245, %v711
        %v714 = vld [vmem:[%s657 + $0x2] sm:$0x1]
        %v715 = vld [vmem:[%s657 + $0x22] sm:$0x1]
        %v719 = vunpack.c.l.s4 1983009808
        %v720 = vunpack.c.0.s8 %v719
        %v721 = vlaneseq
        %v722 = vshrl.u32 %v721, 7
        %v723 = vsub.s32 %v720, %v722
        %v724 = vrot.slane %v714, %v723
        %v726 = vunpack.c.l.s4 1983009808
        %v727 = vunpack.c.0.s8 %v726
        %v728 = vlaneseq
        %v729 = vshrl.u32 %v728, 7
        %v730 = vsub.s32 %v727, %v729
        %v731 = vrot.slane %v715, %v730
        %v732 = vsel %vm201, %v724, %v724
        %v733 = vsel %vm203, %v724, %v732
        %v734 = vrot.slane %v731, 7
        %v735 = vsel %vm206, %v734, %v733
        %v736 = vsel %vm208, %v734, %v735
        %v737 = vsel %vm210, %v734, %v736
        %v738 = vsel %vm212, %v734, %v737
        %739 = vrot.lane.b32.xlu0 %v738, 32
        %v740 = vpop.permute.xlu0 %739
        %742 = vst.msk [vmem:[%s179 + $0x4] sm:$0x3] %vm275, %v740
        %v743 = vld [vmem:[%s657 + $0x3] sm:$0x1]
        %v744 = vld [vmem:[%s657 + $0x23] sm:$0x1]
        %v748 = vunpack.c.l.s4 1983009808
        %v749 = vunpack.c.0.s8 %v748
        %v750 = vlaneseq
        %v751 = vshrl.u32 %v750, 7
        %v752 = vsub.s32 %v749, %v751
        %v753 = vrot.slane %v743, %v752
        %v755 = vunpack.c.l.s4 1983009808
        %v756 = vunpack.c.0.s8 %v755
        %v757 = vlaneseq
        %v758 = vshrl.u32 %v757, 7
        %v759 = vsub.s32 %v756, %v758
        %v760 = vrot.slane %v744, %v759
        %v761 = vsel %vm201, %v753, %v753
        %v762 = vsel %vm203, %v753, %v761
        %v763 = vrot.slane %v760, 7
        %v764 = vsel %vm206, %v763, %v762
        %v765 = vsel %vm208, %v763, %v764
        %v766 = vsel %vm210, %v763, %v765
        %v767 = vsel %vm212, %v763, %v766
        %768 = vrot.lane.b32.xlu0 %v767, 48
        %v769 = vpop.permute.xlu0 %768
        %771 = vst.msk [vmem:[%s179 + $0x4] sm:$0x3] %vm305, %v769
        %v772 = vld [vmem:[%s657 + $0x4] sm:$0x1]
        %v773 = vld [vmem:[%s657 + $0x24] sm:$0x1]
        %v777 = vunpack.c.l.s4 1983009808
        %v778 = vunpack.c.0.s8 %v777
        %v779 = vlaneseq
        %v780 = vshrl.u32 %v779, 7
        %v781 = vsub.s32 %v778, %v780
        %v782 = vrot.slane %v772, %v781
        %v784 = vunpack.c.l.s4 1983009808
        %v785 = vunpack.c.0.s8 %v784
        %v786 = vlaneseq
        %v787 = vshrl.u32 %v786, 7
        %v788 = vsub.s32 %v785, %v787
        %v789 = vrot.slane %v773, %v788
        %v790 = vsel %vm201, %v782, %v782
        %v791 = vsel %vm203, %v782, %v790
        %v792 = vrot.slane %v789, 7
        %v793 = vsel %vm206, %v792, %v791
        %v794 = vsel %vm208, %v792, %v793
        %v795 = vsel %vm210, %v792, %v794
        %v796 = vsel %vm212, %v792, %v795
        %797 = vrot.lane.b32.xlu0 %v796, 64
        %v798 = vpop.permute.xlu0 %797
        %800 = vst.msk [vmem:[%s179 + $0x4] sm:$0x3] %vm335, %v798
        %v801 = vld [vmem:[%s657 + $0x5] sm:$0x1]
        %v802 = vld [vmem:[%s657 + $0x25] sm:$0x1]
        %v806 = vunpack.c.l.s4 1983009808
        %v807 = vunpack.c.0.s8 %v806
        %v808 = vlaneseq
        %v809 = vshrl.u32 %v808, 7
        %v810 = vsub.s32 %v807, %v809
        %v811 = vrot.slane %v801, %v810
        %v813 = vunpack.c.l.s4 1983009808
        %v814 = vunpack.c.0.s8 %v813
        %v815 = vlaneseq
        %v816 = vshrl.u32 %v815, 7
        %v817 = vsub.s32 %v814, %v816
        %v818 = vrot.slane %v802, %v817
        %v819 = vsel %vm201, %v811, %v811
        %v820 = vsel %vm203, %v811, %v819
        %v821 = vrot.slane %v818, 7
        %v822 = vsel %vm206, %v821, %v820
        %v823 = vsel %vm208, %v821, %v822
        %v824 = vsel %vm210, %v821, %v823
        %v825 = vsel %vm212, %v821, %v824
        %826 = vrot.lane.b32.xlu0 %v825, 80
        %v827 = vpop.permute.xlu0 %826
        %829 = vst.msk [vmem:[%s179 + $0x4] sm:$0x3] %vm365, %v827
        %v830 = vld [vmem:[%s657 + $0x6] sm:$0x1]
        %v831 = vld [vmem:[%s657 + $0x26] sm:$0x1]
        %v835 = vunpack.c.l.s4 1983009808
        %v836 = vunpack.c.0.s8 %v835
        %v837 = vlaneseq
        %v838 = vshrl.u32 %v837, 7
        %v839 = vsub.s32 %v836, %v838
        %v840 = vrot.slane %v830, %v839
        %v842 = vunpack.c.l.s4 1983009808
        %v843 = vunpack.c.0.s8 %v842
        %v844 = vlaneseq
        %v845 = vshrl.u32 %v844, 7
        %v846 = vsub.s32 %v843, %v845
        %v847 = vrot.slane %v831, %v846
        %v848 = vsel %vm201, %v840, %v840
        %v849 = vsel %vm203, %v840, %v848
        %v850 = vrot.slane %v847, 7
        %v851 = vsel %vm206, %v850, %v849
        %v852 = vsel %vm208, %v850, %v851
        %v853 = vsel %vm210, %v850, %v852
        %v854 = vsel %vm212, %v850, %v853
        %855 = vrot.lane.b32.xlu0 %v854, 96
        %v856 = vpop.permute.xlu0 %855
        %858 = vst.msk [vmem:[%s179 + $0x4] sm:$0x3] %vm395, %v856
        %v859 = vld [vmem:[%s657 + $0x7] sm:$0x1]
        %v860 = vld [vmem:[%s657 + $0x27] sm:$0x1]
        %v864 = vunpack.c.l.s4 1983009808
        %v865 = vunpack.c.0.s8 %v864
        %v866 = vlaneseq
        %v867 = vshrl.u32 %v866, 7
        %v868 = vsub.s32 %v865, %v867
        %v869 = vrot.slane %v859, %v868
        %v871 = vunpack.c.l.s4 1983009808
        %v872 = vunpack.c.0.s8 %v871
        %v873 = vlaneseq
        %v874 = vshrl.u32 %v873, 7
        %v875 = vsub.s32 %v872, %v874
        %v876 = vrot.slane %v860, %v875
        %v877 = vsel %vm201, %v869, %v869
        %v878 = vsel %vm203, %v869, %v877
        %v879 = vrot.slane %v876, 7
        %v880 = vsel %vm206, %v879, %v878
        %v881 = vsel %vm208, %v879, %v880
        %v882 = vsel %vm210, %v879, %v881
        %v883 = vsel %vm212, %v879, %v882
        %884 = vrot.lane.b32.xlu0 %v883, 112
        %v885 = vpop.permute.xlu0 %884
        %887 = vst.msk [vmem:[%s179 + $0x4] sm:$0x3] %vm425, %v885
        %v888 = vld [vmem:[%s657 + $0x8] sm:$0x1]
        %v889 = vld [vmem:[%s657 + $0x28] sm:$0x1]
        %v893 = vunpack.c.l.s4 1983009808
        %v894 = vunpack.c.0.s8 %v893
        %v895 = vlaneseq
        %v896 = vshrl.u32 %v895, 7
        %v897 = vsub.s32 %v894, %v896
        %v898 = vrot.slane %v888, %v897
        %v900 = vunpack.c.l.s4 1983009808
        %v901 = vunpack.c.0.s8 %v900
        %v902 = vlaneseq
        %v903 = vshrl.u32 %v902, 7
        %v904 = vsub.s32 %v901, %v903
        %v905 = vrot.slane %v889, %v904
        %v906 = vsel %vm201, %v898, %v898
        %v907 = vsel %vm203, %v898, %v906
        %v908 = vrot.slane %v905, 7
        %v909 = vsel %vm206, %v908, %v907
        %v910 = vsel %vm208, %v908, %v909
        %v911 = vsel %vm210, %v908, %v910
        %v912 = vsel %vm212, %v908, %v911
        %914 = vst.msk [vmem:[%s179 + $0x6] sm:$0x3] %vm215, %v912
        %v915 = vld [vmem:[%s657 + $0x9] sm:$0x1]
        %v916 = vld [vmem:[%s657 + $0x29] sm:$0x1]
        %v920 = vunpack.c.l.s4 1983009808
        %v921 = vunpack.c.0.s8 %v920
        %v922 = vlaneseq
        %v923 = vshrl.u32 %v922, 7
        %v924 = vsub.s32 %v921, %v923
        %v925 = vrot.slane %v915, %v924
        %v927 = vunpack.c.l.s4 1983009808
        %v928 = vunpack.c.0.s8 %v927
        %v929 = vlaneseq
        %v930 = vshrl.u32 %v929, 7
        %v931 = vsub.s32 %v928, %v930
        %v932 = vrot.slane %v916, %v931
        %v933 = vsel %vm201, %v925, %v925
        %v934 = vsel %vm203, %v925, %v933
        %v935 = vrot.slane %v932, 7
        %v936 = vsel %vm206, %v935, %v934
        %v937 = vsel %vm208, %v935, %v936
        %v938 = vsel %vm210, %v935, %v937
        %v939 = vsel %vm212, %v935, %v938
        %940 = vrot.lane.b32.xlu0 %v939, 16
        %v941 = vpop.permute.xlu0 %940
        %943 = vst.msk [vmem:[%s179 + $0x6] sm:$0x3] %vm245, %v941
        %v944 = vld [vmem:[%s657 + $0xa] sm:$0x1]
        %v945 = vld [vmem:[%s657 + $0x2a] sm:$0x1]
        %v949 = vunpack.c.l.s4 1983009808
        %v950 = vunpack.c.0.s8 %v949
        %v951 = vlaneseq
        %v952 = vshrl.u32 %v951, 7
        %v953 = vsub.s32 %v950, %v952
        %v954 = vrot.slane %v944, %v953
        %v956 = vunpack.c.l.s4 1983009808
        %v957 = vunpack.c.0.s8 %v956
        %v958 = vlaneseq
        %v959 = vshrl.u32 %v958, 7
        %v960 = vsub.s32 %v957, %v959
        %v961 = vrot.slane %v945, %v960
        %v962 = vsel %vm201, %v954, %v954
        %v963 = vsel %vm203, %v954, %v962
        %v964 = vrot.slane %v961, 7
        %v965 = vsel %vm206, %v964, %v963
        %v966 = vsel %vm208, %v964, %v965
        %v967 = vsel %vm210, %v964, %v966
        %v968 = vsel %vm212, %v964, %v967
        %969 = vrot.lane.b32.xlu0 %v968, 32
        %v970 = vpop.permute.xlu0 %969
        %972 = vst.msk [vmem:[%s179 + $0x6] sm:$0x3] %vm275, %v970
        %v973 = vld [vmem:[%s657 + $0xb] sm:$0x1]
        %v974 = vld [vmem:[%s657 + $0x2b] sm:$0x1]
        %v978 = vunpack.c.l.s4 1983009808
        %v979 = vunpack.c.0.s8 %v978
        %v980 = vlaneseq
        %v981 = vshrl.u32 %v980, 7
        %v982 = vsub.s32 %v979, %v981
        %v983 = vrot.slane %v973, %v982
        %v985 = vunpack.c.l.s4 1983009808
        %v986 = vunpack.c.0.s8 %v985
        %v987 = vlaneseq
        %v988 = vshrl.u32 %v987, 7
        %v989 = vsub.s32 %v986, %v988
        %v990 = vrot.slane %v974, %v989
        %v991 = vsel %vm201, %v983, %v983
        %v992 = vsel %vm203, %v983, %v991
        %v993 = vrot.slane %v990, 7
        %v994 = vsel %vm206, %v993, %v992
        %v995 = vsel %vm208, %v993, %v994
        %v996 = vsel %vm210, %v993, %v995
        %v997 = vsel %vm212, %v993, %v996
        %998 = vrot.lane.b32.xlu0 %v997, 48
        %v999 = vpop.permute.xlu0 %998
        %1001 = vst.msk [vmem:[%s179 + $0x6] sm:$0x3] %vm305, %v999
        %v1002 = vld [vmem:[%s657 + $0xc] sm:$0x1]
        %v1003 = vld [vmem:[%s657 + $0x2c] sm:$0x1]
        %v1007 = vunpack.c.l.s4 1983009808
        %v1008 = vunpack.c.0.s8 %v1007
        %v1009 = vlaneseq
        %v1010 = vshrl.u32 %v1009, 7
        %v1011 = vsub.s32 %v1008, %v1010
        %v1012 = vrot.slane %v1002, %v1011
        %v1014 = vunpack.c.l.s4 1983009808
        %v1015 = vunpack.c.0.s8 %v1014
        %v1016 = vlaneseq
        %v1017 = vshrl.u32 %v1016, 7
        %v1018 = vsub.s32 %v1015, %v1017
        %v1019 = vrot.slane %v1003, %v1018
        %v1020 = vsel %vm201, %v1012, %v1012
        %v1021 = vsel %vm203, %v1012, %v1020
        %v1022 = vrot.slane %v1019, 7
        %v1023 = vsel %vm206, %v1022, %v1021
        %v1024 = vsel %vm208, %v1022, %v1023
        %v1025 = vsel %vm210, %v1022, %v1024
        %v1026 = vsel %vm212, %v1022, %v1025
        %1027 = vrot.lane.b32.xlu0 %v1026, 64
        %v1028 = vpop.permute.xlu0 %1027
        %1030 = vst.msk [vmem:[%s179 + $0x6] sm:$0x3] %vm335, %v1028
        %v1031 = vld [vmem:[%s657 + $0xd] sm:$0x1]
        %v1032 = vld [vmem:[%s657 + $0x2d] sm:$0x1]
        %v1036 = vunpack.c.l.s4 1983009808
        %v1037 = vunpack.c.0.s8 %v1036
        %v1038 = vlaneseq
        %v1039 = vshrl.u32 %v1038, 7
        %v1040 = vsub.s32 %v1037, %v1039
        %v1041 = vrot.slane %v1031, %v1040
        %v1043 = vunpack.c.l.s4 1983009808
        %v1044 = vunpack.c.0.s8 %v1043
        %v1045 = vlaneseq
        %v1046 = vshrl.u32 %v1045, 7
        %v1047 = vsub.s32 %v1044, %v1046
        %v1048 = vrot.slane %v1032, %v1047
        %v1049 = vsel %vm201, %v1041, %v1041
        %v1050 = vsel %vm203, %v1041, %v1049
        %v1051 = vrot.slane %v1048, 7
        %v1052 = vsel %vm206, %v1051, %v1050
        %v1053 = vsel %vm208, %v1051, %v1052
        %v1054 = vsel %vm210, %v1051, %v1053
        %v1055 = vsel %vm212, %v1051, %v1054
        %1056 = vrot.lane.b32.xlu0 %v1055, 80
        %v1057 = vpop.permute.xlu0 %1056
        %1059 = vst.msk [vmem:[%s179 + $0x6] sm:$0x3] %vm365, %v1057
        %v1060 = vld [vmem:[%s657 + $0xe] sm:$0x1]
        %v1061 = vld [vmem:[%s657 + $0x2e] sm:$0x1]
        %v1065 = vunpack.c.l.s4 1983009808
        %v1066 = vunpack.c.0.s8 %v1065
        %v1067 = vlaneseq
        %v1068 = vshrl.u32 %v1067, 7
        %v1069 = vsub.s32 %v1066, %v1068
        %v1070 = vrot.slane %v1060, %v1069
        %v1072 = vunpack.c.l.s4 1983009808
        %v1073 = vunpack.c.0.s8 %v1072
        %v1074 = vlaneseq
        %v1075 = vshrl.u32 %v1074, 7
        %v1076 = vsub.s32 %v1073, %v1075
        %v1077 = vrot.slane %v1061, %v1076
        %v1078 = vsel %vm201, %v1070, %v1070
        %v1079 = vsel %vm203, %v1070, %v1078
        %v1080 = vrot.slane %v1077, 7
        %v1081 = vsel %vm206, %v1080, %v1079
        %v1082 = vsel %vm208, %v1080, %v1081
        %v1083 = vsel %vm210, %v1080, %v1082
        %v1084 = vsel %vm212, %v1080, %v1083
        %1085 = vrot.lane.b32.xlu0 %v1084, 96
        %v1086 = vpop.permute.xlu0 %1085
        %1088 = vst.msk [vmem:[%s179 + $0x6] sm:$0x3] %vm395, %v1086
        %v1089 = vld [vmem:[%s657 + $0xf] sm:$0x1]
        %v1090 = vld [vmem:[%s657 + $0x2f] sm:$0x1]
        %v1094 = vunpack.c.l.s4 1983009808
        %v1095 = vunpack.c.0.s8 %v1094
        %v1096 = vlaneseq
        %v1097 = vshrl.u32 %v1096, 7
        %v1098 = vsub.s32 %v1095, %v1097
        %v1099 = vrot.slane %v1089, %v1098
        %v1101 = vunpack.c.l.s4 1983009808
        %v1102 = vunpack.c.0.s8 %v1101
        %v1103 = vlaneseq
        %v1104 = vshrl.u32 %v1103, 7
        %v1105 = vsub.s32 %v1102, %v1104
        %v1106 = vrot.slane %v1090, %v1105
        %v1107 = vsel %vm201, %v1099, %v1099
        %v1108 = vsel %vm203, %v1099, %v1107
        %v1109 = vrot.slane %v1106, 7
        %v1110 = vsel %vm206, %v1109, %v1108
        %v1111 = vsel %vm208, %v1109, %v1110
        %v1112 = vsel %vm210, %v1109, %v1111
        %v1113 = vsel %vm212, %v1109, %v1112
        %1114 = vrot.lane.b32.xlu0 %v1113, 112
        %v1115 = vpop.permute.xlu0 %1114
        %1117 = vst.msk [vmem:[%s179 + $0x6] sm:$0x3] %vm425, %v1115
        %s1118 = sand.u32 %s68, 1
        %s1119 = scalar_lea.sflag [#allocation4], %s1118
        %s1120 = sand.u32 %s68, 1
        %s1121 = smul.addr %s1120, 8
        %s1122 = scalar_lea.vmem [#allocation5], %s1121
        // Predicated region
        $region29: #{linear_view.1} parent=23 // pred_check
          %p1123 = pneg %p78
        $region30: #{linear_view.1} parent=23 // pred_check_branch
          %1125 = sbr.rel (%p1123) target = $region32
        $region31: #{linear_view.1} parent=23 // pred_region
          %s1126 = smul.u32 4, %s23
          %s1128 = ssub.s32 128, 128
          %1129 = vsyncadd %s1119, %s1128
          %s1130 = smul.addr %s22, 8
          %s1131 = sadd.s32 %s1126, %s1130
          %s1132 = smul.addr %s1131, 32
          %s1133 = scalar_lea.hbm %s1, %s1132
          %s1135 = sshll.u32 %s1122, 4
          %s1136 = int_to_ptr.vmem [resolvable:$true] %s1135
          %1138 = dma.vmem_to_hbm [thread:$0]  %s1136, 128, %s1133, %s1119
        $region32: #{linear_view.1} parent=23 // pred_fallthru
          _
      $region24: #{linear_view.1} parent=5 // pred_fallthru
        _
      %p1139 = scmp.le.s32.totalorder 2, %s13
      // Predicated region
      $region33: #{linear_view.1} parent=5 // pred_check
        %p1140 = pneg %p1139
      $region34: #{linear_view.1} parent=5 // pred_check_branch
        %1142 = sbr.rel (%p1140) target = $region36
      $region35: #{linear_view.1} parent=5 // pred_region
        %s1143 = ssub.s32 %s13, 2
        // Predicated region
        $region37: #{linear_view.1} parent=35 // pred_check
          %p1144 = pneg %p84
        $region38: #{linear_view.1} parent=35 // pred_check_branch
          %1146 = sbr.rel (%p1144) target = $region40
        $region39: #{linear_view.1} parent=35 // pred_region
          %s1147 = sand.u32 %s69, 1
          %s1148 = scalar_lea.sflag [#allocation4], %s1147
          %s1149 = sand.u32 %s69, 1
          %s1150 = smul.addr %s1149, 8
          %s1151 = scalar_lea.vmem [#allocation5], %s1150
          %1152 = dma.done %s1148, 128
        $region40: #{linear_view.1} parent=35 // pred_fallthru
          _
      $region36: #{linear_view.1} parent=5 // pred_fallthru
        _
    $region6: #{linear_view.1} parent=1 // loop_footer
      %s17 = sadd.s32 1, %s13
    $region7: #{linear_view.1} parent=1 // loop_footer_branch
      %12 = sbr.rel target = $region3
    $region8: #{linear_view.1} parent=1 // loop_exit
      _
    %1153 = vsyncpa [#allocation3], 1
    %s1154 = scalar_lea.sflag [#allocation3], 1
    %1155 = vsyncpa %s1154, 1
    %1156 = vsyncpa [#allocation4], 1
    %s1157 = scalar_lea.sflag [#allocation4], 1
    %1158 = vsyncpa %s1157, 1

</llo_original>
